<compile_context>
chip_gen: v6e
topology: v6e:2x2x1
jax: 0.10.0
libtpu: 0.0.40
codegen_flags: <defaults>
</compile_context>

<pallas_src>
import math

import jax
import jax.numpy as jnp
from jax.experimental import pallas as pl
from jax.experimental.pallas import tpu as pltpu


def _discriminator_kernel(node_ref, graph_ref, out_ref):
    # Elementwise product + reduction over the hidden (lane) axis,
    # accumulated in float32, cast on the final store.
    node = node_ref[...].astype(jnp.float32)
    graph = graph_ref[...].astype(jnp.float32)
    row_sums = jnp.sum(node * graph, axis=1, keepdims=True)  # (TILE_N, 1) f32
    out_ref[...] = row_sums.astype(out_ref.dtype)


def _round_up(x, m):
    return ((x + m - 1) // m) * m


# Conservative double-buffered VMEM budget: fits under the smallest default
# scoped-VMEM limit (16 MiB on v5e; 32 MiB on v6e/v7x) with headroom.
_VMEM_BUDGET_BYTES = 12 * 1024 * 1024
_MAX_TILE_N = 1024  # ~86% of HBM roofline for f32 elementwise at 1024 rows.


def _choose_tile_n(n, h, itemsize):
    """Biggest row tile that keeps 2 inputs x 2 buffers under the VMEM budget."""
    h_pad = _round_up(h, 128)                # VMEM tiles are lane-padded
    per_row_bytes = 4 * h_pad * itemsize     # 2 inputs x 2 pipeline buffers
    tile = _VMEM_BUDGET_BYTES // per_row_bytes
    tile = min(tile, _MAX_TILE_N)
    tile = max(8, (tile // 8) * 8)           # keep a sublane multiple
    tile = min(tile, _round_up(n, 8))        # don't exceed the (padded) rows
    return int(tile)


def discriminator_forward(node_embedding, graph_embedding):
    """res = sum(node_embedding * graph_embedding, dim=1)  -> (N,)"""
    n, h = node_embedding.shape
    assert graph_embedding.shape == (n, h)

    itemsize = jnp.dtype(node_embedding.dtype).itemsize
    tile_n = _choose_tile_n(n, h, itemsize)
    num_tiles = pl.cdiv(n, tile_n)           # partial last tile is masked by Pallas

    out = pl.pallas_call(
        _discriminator_kernel,
        out_shape=jax.ShapeDtypeStruct((n, 1), node_embedding.dtype),
        grid_spec=pltpu.PrefetchScalarGridSpec(
            num_scalar_prefetch=0,
            grid=(num_tiles,),
            in_specs=[
                pl.BlockSpec((tile_n, h), lambda i: (i, 0)),
                pl.BlockSpec((tile_n, h), lambda i: (i, 0)),
            ],
            out_specs=pl.BlockSpec((tile_n, 1), lambda i: (i, 0)),
        ),
        compiler_params=pltpu.CompilerParams(
            # Independent row tiles: shard the grid across TensorCores (v7x).
            dimension_semantics=("parallel",),
        ),
    )(node_embedding, graph_embedding)
    return out[:, 0]


def xavier_uniform(key, shape, dtype=jnp.float32):
    # Matches torch.nn.init.xavier_uniform_ for a 2D (fan_out, fan_in) tensor.
    fan_out, fan_in = shape
    limit = math.sqrt(6.0 / (fan_in + fan_out))
    return jax.random.uniform(key, shape, dtype=dtype, minval=-limit, maxval=limit)


if __name__ == "__main__":
    n_hidden = 32
    n_nodes = 8

    key = jax.random.PRNGKey(0)
    k_w, k_node, k_graph, k_node2, k_graph2 = jax.random.split(key, 5)

    # Parameter of the module (unused by forward, kept for shape parity).
    weight = xavier_uniform(k_w, (n_hidden, n_hidden))  # noqa: F841

    # --- small demo shape (matches the module defaults) ---
    node_embedding = jax.random.normal(k_node, (n_nodes, n_hidden), dtype=jnp.float32)
    graph_embedding = jax.random.normal(k_graph, (n_nodes, n_hidden), dtype=jnp.float32)

    res = discriminator_forward(node_embedding, graph_embedding)
    jax.block_until_ready(res)

    ref = jnp.sum(node_embedding * graph_embedding, axis=1)
    assert res.shape == (n_nodes,)
    assert jnp.allclose(res, ref, atol=1e-5, rtol=1e-5)

    # --- larger graph: exercises multi-tile grid + partial last tile masking ---
    n_big = 1030  # not a multiple of the chosen tile -> partial final block
    node_big = jax.random.normal(k_node2, (n_big, n_hidden), dtype=jnp.float32)
    graph_big = jax.random.normal(k_graph2, (n_big, n_hidden), dtype=jnp.float32)

    res_big = discriminator_forward(node_big, graph_big)
    jax.block_until_ready(res_big)

    ref_big = jnp.sum(node_big * graph_big, axis=1)
    assert res_big.shape == (n_big,)
    assert jnp.allclose(res_big, ref_big, atol=1e-5, rtol=1e-5)

    print("KERNEL_OK")
</pallas_src>

<mosaic_0001>
module attributes {stable_mosaic.version = 11 : i64} {
  func.func @_discriminator_kernel(%arg0: i32, %arg1: memref<8x32xf32, #tpu.memory_space<vmem>>, %arg2: memref<8x32xf32, #tpu.memory_space<vmem>>, %arg3: memref<8x1xf32, #tpu.memory_space<vmem>>) attributes {dimension_semantics = [#tpu.dimension_semantics<parallel>], iteration_bounds = array<i64: 1>, scalar_prefetch = 0 : i64, scratch_operands = 0 : i64, tpu.core_type = #tpu.core_type<tc>, window_params = [{transform_indices = @transform_0, window_bounds = array<i64: 8, 32>}, {transform_indices = @transform_1, window_bounds = array<i64: 8, 32>}, {transform_indices = @transform_2, window_bounds = array<i64: 8, 1>}]} {
    %c0 = arith.constant 0 : index
    %c0_0 = arith.constant 0 : index
    %0 = vector.load %arg1[%c0, %c0_0] : memref<8x32xf32, #tpu.memory_space<vmem>>, vector<8x32xf32>
    %c0_1 = arith.constant 0 : index
    %c0_2 = arith.constant 0 : index
    %1 = vector.load %arg2[%c0_1, %c0_2] : memref<8x32xf32, #tpu.memory_space<vmem>>, vector<8x32xf32>
    %2 = arith.mulf %0, %1 : vector<8x32xf32>
    %cst = arith.constant dense<0.000000e+00> : vector<8xf32>
    %3 = vector.multi_reduction <add>, %2, %cst [1] : vector<8x32xf32> to vector<8xf32>
    %4 = vector.shape_cast %3 : vector<8xf32> to vector<8x1xf32>
    %c0_3 = arith.constant 0 : index
    %c0_4 = arith.constant 0 : index
    %5 = vector.load %arg3[%c0_3, %c0_4] : memref<8x1xf32, #tpu.memory_space<vmem>>, vector<8x1xf32>
    tpu.vector_store %arg3[%c0_3, %c0_4], %4 {strides = array<i32>} : memref<8x1xf32, #tpu.memory_space<vmem>>, vector<8x1xf32>,
    return
  }
  func.func @transform_0(%arg0: i32) -> (i32, i32) {
    %c0_i32 = arith.constant 0 : i32
    %c0_i32_0 = arith.constant 0 : i32
    return %arg0, %c0_i32 : i32, i32
  }
  func.func @transform_1(%arg0: i32) -> (i32, i32) {
    %c0_i32 = arith.constant 0 : i32
    %c0_i32_0 = arith.constant 0 : i32
    return %arg0, %c0_i32 : i32, i32
  }
  func.func @transform_2(%arg0: i32) -> (i32, i32) {
    %c0_i32 = arith.constant 0 : i32
    %c0_i32_0 = arith.constant 0 : i32
    return %arg0, %c0_i32 : i32, i32
  }
}

</mosaic_0001>

<llo_original>
// kernel: tpu_custom_call.1
$region0: #{tpu_custom_call.1}
  #allocation0 [shape = 'u32[]', space=smem, size = 0x4, offset = 0x4, fixed_abs, tag = 'smem constant byte address 0x4 - core index']
  #allocation1 [shape = 'u32[144,128]{1,0:T(1,128)}', space=vmem, size = 0x12000, scoped, tag = 'internal scratch']
  %s0 = inlined_call_operand.hbm [shape: f32[8,32], index: 0, kind: input, shape index: {}]
  %s1 = inlined_call_operand.hbm [shape: f32[8,32], index: 1, kind: input, shape index: {}]
  %s2 = inlined_call_operand.vmem [shape: f32[8,1], index: 2, kind: output, shape index: {}]
  %s3 = sld [smem:[#allocation0]]
  $region26: #{tpu_custom_call.1} parent=0
    _
  %s5 = ssub.s32 1, %s3
  %s6 = scalar_select 0, %s5, %s3
  $region1: #{tpu_custom_call.1} parent=0
    #allocation2 [shape = 'u8[4096]{0}', space=vmem, size = 0x1000, scoped, tag = 'input window, operand 0, single buffered']
    #allocation3 [shape = 's32[1]{0}', space=sflag, size = 0x4, scoped, tag = 'scoped memory for tpu_custom_call.1']
    #allocation4 [shape = 'u8[4096]{0}', space=vmem, size = 0x1000, scoped, tag = 'input window, operand 1, single buffered']
    #allocation5 [shape = 's32[1]{0}', space=sflag, size = 0x4, scoped, tag = 'scoped memory for tpu_custom_call.1']
    %7 = vsyncpa [#allocation3], 0
    %8 = vsyncpa [#allocation5], 0
    // Predicated region
    $region2: #{tpu_custom_call.1} parent=1 // pred_check
      _
    $region3: #{tpu_custom_call.1} parent=1 // pred_check_branch
      %10 = sbr.rel (0) target = $region5
    $region4: #{tpu_custom_call.1} parent=1 // pred_region
      %s12 = ssub.s32 128, 128
      %13 = vsyncadd [#allocation3], %s12
      %s15 = sshll.u32 [#allocation2], 4
      %s16 = int_to_ptr.vmem [resolvable:$true] %s15
      %18 = dma.hbm_to_vmem [thread:$0]  %s0, 128, %s16, [#allocation3]
    $region5: #{tpu_custom_call.1} parent=1 // pred_fallthru
      _
    // Predicated region
    $region6: #{tpu_custom_call.1} parent=1 // pred_check
      _
    $region7: #{tpu_custom_call.1} parent=1 // pred_check_branch
      %20 = sbr.rel (0) target = $region9
    $region8: #{tpu_custom_call.1} parent=1 // pred_region
      %s22 = ssub.s32 128, 128
      %23 = vsyncadd [#allocation5], %s22
      %s25 = sshll.u32 [#allocation4], 4
      %s26 = int_to_ptr.vmem [resolvable:$true] %s25
      %28 = dma.hbm_to_vmem [thread:$0]  %s1, 128, %s26, [#allocation5]
    $region9: #{tpu_custom_call.1} parent=1 // pred_fallthru
      _
    // Predicated region
    $region10: #{tpu_custom_call.1} parent=1 // pred_check
      _
    $region11: #{tpu_custom_call.1} parent=1 // pred_check_branch
      %30 = sbr.rel (0) target = $region13
    $region12: #{tpu_custom_call.1} parent=1 // pred_region
      %31 = dma.done [#allocation3], 128
    $region13: #{tpu_custom_call.1} parent=1 // pred_fallthru
      _
    // Predicated region
    $region14: #{tpu_custom_call.1} parent=1 // pred_check
      _
    $region15: #{tpu_custom_call.1} parent=1 // pred_check_branch
      %33 = sbr.rel (0) target = $region17
    $region16: #{tpu_custom_call.1} parent=1 // pred_region
      %34 = dma.done [#allocation5], 128
    $region17: #{tpu_custom_call.1} parent=1 // pred_fallthru
      _
    %v35 = vld [vmem:[#allocation2] sm:$0xff]
    %v36 = vld [vmem:[#allocation4] sm:$0xff]
    %v37 = vmul.f32 %v35, %v36
    %vm38 = vcmask 261120
    %v39 = vsel %vm38, %v37, 0.0
    %40 = vadd.xlane.f32.xlu0 %v39
    %v41 = vpop.xlane.xlu0 %40
    %vm42 = vcmask 7168
    %43 = vst.msk [vmem:[%s2] sm:$0xff] %vm42, %v41
    // Predicated region
    $region18: #{tpu_custom_call.1} parent=1 // pred_check
      _
    $region19: #{tpu_custom_call.1} parent=1 // pred_check_branch
      %45 = sbr.rel (0) target = $region21
    $region20: #{tpu_custom_call.1} parent=1 // pred_region
      _
    $region21: #{tpu_custom_call.1} parent=1 // pred_fallthru
      _
    // Predicated region
    $region22: #{tpu_custom_call.1} parent=1 // pred_check
      _
    $region23: #{tpu_custom_call.1} parent=1 // pred_check_branch
      %47 = sbr.rel (0) target = $region25
    $region24: #{tpu_custom_call.1} parent=1 // pred_region
      _
    $region25: #{tpu_custom_call.1} parent=1 // pred_fallthru
      _
    %48 = vsyncpa [#allocation3], 1
    %49 = vsyncpa [#allocation5], 1

</llo_original>
